<compile_context>
chip_gen: v7x
topology: tpu7x:2x2x1
jax: 0.10.0
libtpu: 0.0.40
codegen_flags: <defaults>
</compile_context>

<pallas_src>
import functools
import math

import jax
import jax.numpy as jnp
from jax.experimental import pallas as pl
from jax.experimental.pallas import tpu as pltpu


# --------------------------------------------------------------------------- #
# VMEM budget / tiling helpers
# --------------------------------------------------------------------------- #
@functools.lru_cache(maxsize=None)
def _vmem_limit():
    """Per-generation scoped-VMEM budget: ~75% of physical VMEM, leaving headroom
    for Mosaic internal scratch / double buffers / semaphores.
    ~48 MiB on v7x (64 MiB physical), ~96 MiB on v5e/v6e (128 MiB physical)."""
    cap = None
    try:
        cap = getattr(pltpu.get_tpu_info(), "vmem_capacity_bytes", None)
    except Exception:
        cap = None
    if not cap:
        cap = 64 * 1024 * 1024          # conservative fallback (v7x-sized)
    return int(min(cap * 3 // 4, 100 * 1024 * 1024))


def _round_up(x, m):
    return (x + m - 1) // m * m


def _pick_row_tile(M, max_tile=512):
    """Largest MXU-friendly row tile (<= max_tile) dividing the padded row count,
    with a light preference for tiles giving an even grid count (v7x megacore)."""
    Mp = _round_up(M, 8)
    cands = [t for t in (2048, 1024, 512, 256, 128, 64, 32, 16, 8)
             if t <= max(max_tile, 8)]
    divisors = [t for t in cands if Mp % t == 0]
    if not divisors:
        return 8, Mp
    best = divisors[0]
    if Mp // best > 1 and (Mp // best) % 2 == 1:
        for t in divisors:
            if t >= 256 and (Mp // t) % 2 == 0:
                best = t
                break
    return best, Mp


def _pick_inter_tile(I):
    """FFN intermediate (K) tile for the non-resident fallback path."""
    for t in (1024, 512, 256, 128):
        if I > t and I % t == 0:
            return t
    return I


def _pad_rows(x, Mp):
    M = x.shape[0]
    if M == Mp:
        return x
    return jnp.pad(x, ((0, Mp - M), (0, 0)))


# --------------------------------------------------------------------------- #
# LayerNorm (embedding LN)
# --------------------------------------------------------------------------- #
def _ln_kernel(x_ref, g_ref, b_ref, o_ref, *, eps):
    h = x_ref[...].astype(jnp.float32)
    mu = jnp.mean(h, axis=-1, keepdims=True)
    var = jnp.mean((h - mu) ** 2, axis=-1, keepdims=True)
    y = (h - mu) * jax.lax.rsqrt(var + eps)
    o_ref[...] = (y * g_ref[...] + b_ref[...]).astype(o_ref.dtype)


def layernorm(x, gamma, beta, eps=1e-12, out_dtype=jnp.bfloat16):
    """LayerNorm-only path (no dummy zero residual), row-tiled."""
    M, H = x.shape
    per_row = 2 * H * x.dtype.itemsize + 2 * H * 2 + 2 * H * 4
    max_tile = max(int(_vmem_limit() * 0.7) // max(per_row, 1), 8)
    tm, Mp = _pick_row_tile(M, max_tile)
    xp = _pad_rows(x, Mp)
    out = pl.pallas_call(
        functools.partial(_ln_kernel, eps=eps),
        out_shape=jax.ShapeDtypeStruct((Mp, H), out_dtype),
        grid=(Mp // tm,),
        in_specs=[
            pl.BlockSpec((tm, H), lambda i: (i, 0)),
            pl.BlockSpec((1, H), lambda i: (0, 0)),
            pl.BlockSpec((1, H), lambda i: (0, 0)),
        ],
        out_specs=pl.BlockSpec((tm, H), lambda i: (i, 0)),
        compiler_params=pltpu.CompilerParams(
            dimension_semantics=("parallel",), vmem_limit_bytes=_vmem_limit()),
    )(xp, gamma.reshape(1, H), beta.reshape(1, H))
    return out[:M] if Mp != M else out


# --------------------------------------------------------------------------- #
# Fused QKV projection + multi-head self-attention (one batch per grid step)
# --------------------------------------------------------------------------- #
def _attn_kernel(x_ref, wqkv_ref, bqkv_ref, o_ref, qkv_ref, *, num_heads, scale):
    H = x_ref.shape[2]
    Dh = H // num_heads
    x = x_ref[0]                                                    # (S, H) bf16

    # QKV projection straight into a VMEM scratch slab: no HBM round trip.
    qkv = jnp.dot(x, wqkv_ref[...], preferred_element_type=jnp.float32)
    qkv_ref[...] = (qkv + bqkv_ref[...]).astype(qkv_ref.dtype)

    def head_out(h):
        # 1/sqrt(Dh) folded into Q (S*Dh multiplies) instead of the (S,S) scores.
        q = qkv_ref[:, h * Dh:(h + 1) * Dh] * scale
        k = qkv_ref[:, H + h * Dh:H + (h + 1) * Dh]
        v = qkv_ref[:, 2 * H + h * Dh:2 * H + (h + 1) * Dh]
        s = jax.lax.dot_general(q, k, (((1,), (1,)), ((), ())),
                                preferred_element_type=jnp.float32)
        s = s - jnp.max(s, axis=-1, keepdims=True)
        p = jnp.exp(s)
        p = p * pl.reciprocal(jnp.sum(p, axis=-1, keepdims=True), approx=True)
        return jnp.dot(p.astype(v.dtype), v,
                       preferred_element_type=jnp.float32).astype(o_ref.dtype)

    # Store head outputs in 2*Dh-wide pairs (128-lane aligned for head_dim=64):
    # unmasked stores, short live ranges, no wide concatenate.
    h = 0
    while h + 1 < num_heads:
        o_ref[0, :, h * Dh:(h + 2) * Dh] = jnp.concatenate(
            [head_out(h), head_out(h + 1)], axis=-1)
        h += 2
    if h < num_heads:
        o_ref[0, :, h * Dh:(h + 1) * Dh] = head_out(h)


def attention(x, w_qkv, b_qkv, num_heads, B, S):
    """Fused QKV + MHA; grid over batch, all heads per grid step.  No padding
    mask, matching the reference call with attention_mask=None (all-ones)."""
    M, H = x.shape
    scale = 1.0 / math.sqrt(H // num_heads)
    out = pl.pallas_call(
        functools.partial(_attn_kernel, num_heads=num_heads, scale=scale),
        out_shape=jax.ShapeDtypeStruct((B, S, H), x.dtype),
        grid=(B,),
        in_specs=[
            pl.BlockSpec((1, S, H), lambda b: (b, 0, 0)),
            pl.BlockSpec((H, 3 * H), lambda b: (0, 0)),     # resident weight
            pl.BlockSpec((1, 3 * H), lambda b: (0, 0)),
        ],
        out_specs=pl.BlockSpec((1, S, H), lambda b: (b, 0, 0)),
        scratch_shapes=[pltpu.VMEM((S, 3 * H), x.dtype)],
        compiler_params=pltpu.CompilerParams(
            dimension_semantics=("parallel",), vmem_limit_bytes=_vmem_limit()),
    )(x.reshape(B, S, H), w_qkv, b_qkv.reshape(1, 3 * H))
    return out.reshape(M, H)


# --------------------------------------------------------------------------- #
# Output projection fused with residual-add + LayerNorm
# --------------------------------------------------------------------------- #
def _dense_ln_kernel(x_ref, w_ref, b_ref, res_ref, g_ref, beta_ref, o_ref, *, eps):
    y = jnp.dot(x_ref[...], w_ref[...], preferred_element_type=jnp.float32)
    h = y + b_ref[...] + res_ref[...].astype(jnp.float32)
    mu = jnp.mean(h, axis=-1, keepdims=True)
    var = jnp.mean((h - mu) ** 2, axis=-1, keepdims=True)
    yn = (h - mu) * jax.lax.rsqrt(var + eps)
    o_ref[...] = (yn * g_ref[...] + beta_ref[...]).astype(o_ref.dtype)


def dense_add_ln(x, w, b, residual, gamma, beta, eps=1e-12, out_dtype=jnp.bfloat16):
    """LN((x @ w + b) + residual) with the LN fused into the matmul epilogue."""
    M, K = x.shape
    N = w.shape[1]
    budget = int(_vmem_limit() * 0.7)
    wbytes = 2 * w.size * w.dtype.itemsize                  # double-buffered weight
    per_row = 2 * K * 2 + 4 * N * 2 + 2 * N * 4             # x + res/out (2buf) + f32 temps
    max_tile = max((budget - wbytes) // max(per_row, 1), 8)
    tm, Mp = _pick_row_tile(M, max_tile)
    xp = _pad_rows(x, Mp)
    rp = _pad_rows(residual, Mp)
    out = pl.pallas_call(
        functools.partial(_dense_ln_kernel, eps=eps),
        out_shape=jax.ShapeDtypeStruct((Mp, N), out_dtype),
        grid=(Mp // tm,),
        in_specs=[
            pl.BlockSpec((tm, K), lambda i: (i, 0)),
            pl.BlockSpec((K, N), lambda i: (0, 0)),
            pl.BlockSpec((1, N), lambda i: (0, 0)),
            pl.BlockSpec((tm, N), lambda i: (i, 0)),
            pl.BlockSpec((1, N), lambda i: (0, 0)),
            pl.BlockSpec((1, N), lambda i: (0, 0)),
        ],
        out_specs=pl.BlockSpec((tm, N), lambda i: (i, 0)),
        compiler_params=pltpu.CompilerParams(
            dimension_semantics=("parallel",), vmem_limit_bytes=_vmem_limit()),
    )(xp, w, b.reshape(1, N), rp, gamma.reshape(1, N), beta.reshape(1, N))
    return out[:M] if Mp != M else out


# --------------------------------------------------------------------------- #
# FFN fused end-to-end: gelu(x@wi+bi)@wf + bf + residual + LayerNorm
# --------------------------------------------------------------------------- #
def _ffn_ln_resident_kernel(x_ref, wi_ref, bi_ref, wf_ref, bf_ref, g_ref,
                            beta_ref, o_ref, *, eps):
    x = x_ref[...]
    inter = jnp.dot(x, wi_ref[...], preferred_element_type=jnp.float32)
    # TODO(synk): original BERT gelu is erf-based; tanh approximation used here
    # for robust Mosaic lowering (numerically very close).
    inter = jax.nn.gelu(inter + bi_ref[...], approximate=True)
    y = jnp.dot(inter.astype(wf_ref.dtype), wf_ref[...],
                preferred_element_type=jnp.float32)
    h = y + bf_ref[...] + x.astype(jnp.float32)
    mu = jnp.mean(h, axis=-1, keepdims=True)
    var = jnp.mean((h - mu) ** 2, axis=-1, keepdims=True)
    yn = (h - mu) * jax.lax.rsqrt(var + eps)
    o_ref[...] = (yn * g_ref[...] + beta_ref[...]).astype(o_ref.dtype)


def _ffn_ln_ktiled_kernel(x_ref, wi_ref, bi_ref, wf_ref, bf_ref, g_ref, beta_ref,
                          o_ref, acc_ref, *, eps):
    k = pl.program_id(1)
    nk = pl.num_programs(1)

    @pl.when(k == 0)
    def _():
        acc_ref[...] = jnp.zeros_like(acc_ref)

    inter = jnp.dot(x_ref[...], wi_ref[...], preferred_element_type=jnp.float32)
    inter = jax.nn.gelu(inter + bi_ref[...], approximate=True)
    acc_ref[...] += jnp.dot(inter.astype(wf_ref.dtype), wf_ref[...],
                            preferred_element_type=jnp.float32)

    @pl.when(k == nk - 1)
    def _():
        h = acc_ref[...] + bf_ref[...] + x_ref[...].astype(jnp.float32)
        mu = jnp.mean(h, axis=-1, keepdims=True)
        var = jnp.mean((h - mu) ** 2, axis=-1, keepdims=True)
        yn = (h - mu) * jax.lax.rsqrt(var + eps)
        o_ref[...] = (yn * g_ref[...] + beta_ref[...]).astype(o_ref.dtype)


def ffn_add_ln(x, wi, bi, wf, bf, gamma, beta, eps=1e-12, out_dtype=jnp.bfloat16):
    """LN(gelu(x@wi+bi)@wf + bf + x): intermediate never leaves VMEM."""
    M, H = x.shape
    I = wi.shape[1]
    budget = int(_vmem_limit() * 0.7)
    wbytes = 2 * (wi.size + wf.size) * wi.dtype.itemsize    # double-buffered weights
    per_row_res = 4 * H * 2 + I * 4 + 2 * H * 4             # x/out (2buf) + f32 inter + LN temps
    min_rows = min(256, _round_up(M, 8))

    if wbytes + min_rows * per_row_res <= budget:
        # Resident-weight path: rows-only grid; wi/wf are DMA'd once per layer,
        # eliminating the per-row-tile weight re-stream (HBM-bound FFN on v6e).
        max_tile = max((budget - wbytes) // max(per_row_res, 1), 8)
        tm, Mp = _pick_row_tile(M, max_tile)
        xp = _pad_rows(x, Mp)
        out = pl.pallas_call(
            functools.partial(_ffn_ln_resident_kernel, eps=eps),
            out_shape=jax.ShapeDtypeStruct((Mp, H), out_dtype),
            grid=(Mp // tm,),
            in_specs=[
                pl.BlockSpec((tm, H), lambda i: (i, 0)),
                pl.BlockSpec((H, I), lambda i: (0, 0)),
                pl.BlockSpec((1, I), lambda i: (0, 0)),
                pl.BlockSpec((I, H), lambda i: (0, 0)),
                pl.BlockSpec((1, H), lambda i: (0, 0)),
                pl.BlockSpec((1, H), lambda i: (0, 0)),
                pl.BlockSpec((1, H), lambda i: (0, 0)),
            ],
            out_specs=pl.BlockSpec((tm, H), lambda i: (i, 0)),
            compiler_params=pltpu.CompilerParams(
                dimension_semantics=("parallel",), vmem_limit_bytes=_vmem_limit()),
        )(xp, wi, bi.reshape(1, I), wf, bf.reshape(1, H),
          gamma.reshape(1, H), beta.reshape(1, H))
        return out[:M] if Mp != M else out

    # Fallback for very large I: K-tile the intermediate; triple-buffer the
    # weight tiles so their DMAs hide behind the MXU work.
    ti = _pick_inter_tile(I)
    per_row = 4 * H * 2 + ti * 4 + 3 * H * 4
    w_step = 3 * 2 * H * ti * 2
    max_tile = max((budget - w_step) // max(per_row, 1), 8)
    tm, Mp = _pick_row_tile(M, max_tile)
    xp = _pad_rows(x, Mp)
    try:
        wi_spec = pl.BlockSpec((H, ti), lambda i, k: (0, k),
                               pipeline_mode=pl.Buffered(3))
        wf_spec = pl.BlockSpec((ti, H), lambda i, k: (k, 0),
                               pipeline_mode=pl.Buffered(3))
    except Exception:
        wi_spec = pl.BlockSpec((H, ti), lambda i, k: (0, k))
        wf_spec = pl.BlockSpec((ti, H), lambda i, k: (k, 0))
    out = pl.pallas_call(
        functools.partial(_ffn_ln_ktiled_kernel, eps=eps),
        out_shape=jax.ShapeDtypeStruct((Mp, H), out_dtype),
        grid=(Mp // tm, I // ti),
        in_specs=[
            pl.BlockSpec((tm, H), lambda i, k: (i, 0)),
            wi_spec,
            pl.BlockSpec((1, ti), lambda i, k: (0, k)),
            wf_spec,
            pl.BlockSpec((1, H), lambda i, k: (0, 0)),
            pl.BlockSpec((1, H), lambda i, k: (0, 0)),
            pl.BlockSpec((1, H), lambda i, k: (0, 0)),
        ],
        out_specs=pl.BlockSpec((tm, H), lambda i, k: (i, 0)),
        scratch_shapes=[pltpu.VMEM((tm, H), jnp.float32)],
        compiler_params=pltpu.CompilerParams(
            dimension_semantics=("parallel", "arbitrary"),
            vmem_limit_bytes=_vmem_limit()),
    )(xp, wi, bi.reshape(1, I), wf, bf.reshape(1, H),
      gamma.reshape(1, H), beta.reshape(1, H))
    return out[:M] if Mp != M else out


# --------------------------------------------------------------------------- #
# Masked `code` reduction: VPU multiply + sublane reduce (no M=1 MXU matmuls)
# --------------------------------------------------------------------------- #
def _code_kernel(w_ref, enc_ref, o_ref):
    e = enc_ref[...].astype(jnp.float32)                    # (B, S-1, H)
    o_ref[...] = jnp.sum(e * w_ref[...], axis=1).astype(o_ref.dtype)


def masked_code(enc, weights):
    """code[b] = sum_t enc[b, t, :] * weights[b, t] as one vector-reduce kernel."""
    B, Sm1, H = enc.shape
    return pl.pallas_call(
        _code_kernel,
        out_shape=jax.ShapeDtypeStruct((B, H), enc.dtype),
        grid=(1,),
        in_specs=[
            pl.BlockSpec((B, Sm1, 1), lambda i: (0, 0, 0)),
            pl.BlockSpec((B, Sm1, H), lambda i: (0, 0, 0)),
        ],
        out_specs=pl.BlockSpec((B, H), lambda i: (0, 0)),
        compiler_params=pltpu.CompilerParams(vmem_limit_bytes=_vmem_limit()),
    )(weights.reshape(B, Sm1, 1).astype(jnp.float32), enc)


# --------------------------------------------------------------------------- #
# Synthetic BERT parameters + forward (glue in plain JAX)
# --------------------------------------------------------------------------- #
def init_params(key, cfg):
    H, I = cfg["hidden"], cfg["inter"]
    wdt = jnp.bfloat16

    def normal(k, shape):
        return 0.02 * jax.random.normal(k, shape, jnp.float32)

    keys = iter(jax.random.split(key, 3 + 4 * cfg["layers"]))
    params = {
        "word_emb": normal(next(keys), (cfg["vocab"], H)),
        "pos_emb": normal(next(keys), (cfg["max_pos"], H)),
        "type_emb": normal(next(keys), (cfg["type_vocab"], H)),
        "emb_ln_g": jnp.ones((H,), jnp.float32),
        "emb_ln_b": jnp.zeros((H,), jnp.float32),
        "layers": [],
    }
    for _ in range(cfg["layers"]):
        params["layers"].append({
            # Fused QKV weight (H, 3H): [wq | wk | wv]
            "w_qkv": normal(next(keys), (H, 3 * H)).astype(wdt),
            "b_qkv": jnp.zeros((3 * H,), jnp.float32),
            "wo": normal(next(keys), (H, H)).astype(wdt),
            "bo": jnp.zeros((H,), jnp.float32),
            "ln1_g": jnp.ones((H,), jnp.float32), "ln1_b": jnp.zeros((H,), jnp.float32),
            "wi": normal(next(keys), (H, I)).astype(wdt),
            "bi": jnp.zeros((I,), jnp.float32),
            "wf": normal(next(keys), (I, H)).astype(wdt),
            "bf": jnp.zeros((H,), jnp.float32),
            "ln2_g": jnp.ones((H,), jnp.float32), "ln2_b": jnp.zeros((H,), jnp.float32),
        })
    return params


def bert_encoder_forward(params, ids, segment_ids, cfg):
    B, S = ids.shape
    H, NH = cfg["hidden"], cfg["heads"]
    M = B * S

    # Embeddings (gather is XLA glue) + embedding LayerNorm (Pallas).
    emb = (params["word_emb"][ids]
           + params["pos_emb"][:S][None, :, :]
           + params["type_emb"][segment_ids])
    x = layernorm(emb.reshape(M, H).astype(jnp.float32),
                  params["emb_ln_g"], params["emb_ln_b"])          # bf16 (M, H)

    for layer in params["layers"]:
        # QKV projection fused into the attention kernel (no (M,3H) HBM trip).
        ctx = attention(x, layer["w_qkv"], layer["b_qkv"], NH, B, S)  # (M, H) bf16
        x = dense_add_ln(ctx, layer["wo"], layer["bo"],
                         x, layer["ln1_g"], layer["ln1_b"])        # attn proj + LN
        x = ffn_add_ln(x, layer["wi"], layer["bi"], layer["wf"], layer["bf"],
                       layer["ln2_g"], layer["ln2_b"])             # fused FFN + LN

    last_hidden = x.astype(jnp.float32).reshape(B, S, H)

    # encoded_layers = encoded_layers[-1][:, 1:, :]
    encoded = last_hidden[:, 1:, :]

    code = None
    if cfg["decoder"] == "lstm":
        t_len, pad = cfg["t_len"], cfg["pad"]
        mask = (ids != pad).astype(jnp.float32)                    # (B, S)
        # Weights matching the PyTorch accumulation loop exactly:
        #   code = enc[:, 0, :]; for i in 1..t_len-1: code += enc[:, i, :] * mask[:, i]
        w = jnp.concatenate(
            [jnp.ones((B, 1), jnp.float32),
             mask[:, 1:t_len],
             jnp.zeros((B, (S - 1) - t_len), jnp.float32)], axis=1)
        code = masked_code(encoded, w)                             # (B, H)
        # PyTorch aliasing: in-place `code += ...` mutates the returned slice.
        encoded = encoded.at[:, 0, :].set(code)
        code = code[None, :, :]                                    # unsqueeze(0)

    return encoded, code


# --------------------------------------------------------------------------- #
if __name__ == "__main__":
    cfg = dict(vocab=64, hidden=32, heads=2, inter=64, layers=2,
               max_pos=16, type_vocab=2, t_len=7, pad=0, decoder="lstm")
    B, S = 2, 8

    key = jax.random.PRNGKey(0)
    k_param, k_ids, k_seg = jax.random.split(key, 3)
    params = init_params(k_param, cfg)
    ids = jax.random.randint(k_ids, (B, S), 0, cfg["vocab"], dtype=jnp.int32)
    segment_ids = jax.random.randint(k_seg, (B, S), 0, cfg["type_vocab"], dtype=jnp.int32)

    encoded, code = bert_encoder_forward(params, ids, segment_ids, cfg)
    jax.block_until_ready((encoded, code))

    assert encoded.shape == (B, S - 1, cfg["hidden"])
    assert code.shape == (1, B, cfg["hidden"])
    assert bool(jnp.all(jnp.isfinite(encoded))) and bool(jnp.all(jnp.isfinite(code)))
    print("KERNEL_OK")
</pallas_src>

<mosaic_0001>
module attributes {stable_mosaic.version = 11 : i64} {
  func.func @_ln_kernel(%arg0: i32, %arg1: memref<16x32xf32, #tpu.memory_space<vmem>>, %arg2: memref<1x32xf32, #tpu.memory_space<vmem>>, %arg3: memref<1x32xf32, #tpu.memory_space<vmem>>, %arg4: memref<16x32xbf16, #tpu.memory_space<vmem>>) attributes {dimension_semantics = [#tpu.dimension_semantics<parallel>], iteration_bounds = array<i64: 1>, scalar_prefetch = 0 : i64, scratch_operands = 0 : i64, tpu.core_type = #tpu.core_type<tc>, window_params = [{transform_indices = @transform_0, window_bounds = array<i64: 16, 32>}, {pipeline_mode = #tpu.pipeline_mode<synchronous>, transform_indices = @transform_1, window_bounds = array<i64: 1, 32>}, {pipeline_mode = #tpu.pipeline_mode<synchronous>, transform_indices = @transform_2, window_bounds = array<i64: 1, 32>}, {transform_indices = @transform_3, window_bounds = array<i64: 16, 32>}]} {
    %c0 = arith.constant 0 : index
    %c0_0 = arith.constant 0 : index
    %0 = vector.load %arg1[%c0, %c0_0] : memref<16x32xf32, #tpu.memory_space<vmem>>, vector<16x32xf32>
    %cst = arith.constant dense<0.000000e+00> : vector<16xf32>
    %1 = vector.multi_reduction <add>, %0, %cst [1] : vector<16x32xf32> to vector<16xf32>
    %2 = vector.shape_cast %1 : vector<16xf32> to vector<16x1xf32>
    %cst_1 = arith.constant 3.200000e+01 : f32
    %3 = vector.broadcast %cst_1 : f32 to vector<16x1xf32>
    %4 = arith.divf %2, %3 : vector<16x1xf32>
    %5 = vector.broadcast %4 : vector<16x1xf32> to vector<16x32xf32>
    %6 = arith.subf %0, %5 : vector<16x32xf32>
    %7 = arith.mulf %6, %6 : vector<16x32xf32>
    %cst_2 = arith.constant dense<0.000000e+00> : vector<16xf32>
    %8 = vector.multi_reduction <add>, %7, %cst_2 [1] : vector<16x32xf32> to vector<16xf32>
    %9 = vector.shape_cast %8 : vector<16xf32> to vector<16x1xf32>
    %cst_3 = arith.constant 3.200000e+01 : f32
    %10 = vector.broadcast %cst_3 : f32 to vector<16x1xf32>
    %11 = arith.divf %9, %10 : vector<16x1xf32>
    %12 = vector.broadcast %4 : vector<16x1xf32> to vector<16x32xf32>
    %13 = arith.subf %0, %12 : vector<16x32xf32>
    %cst_4 = arith.constant 9.99999996E-13 : f32
    %14 = vector.broadcast %cst_4 : f32 to vector<16x1xf32>
    %15 = arith.addf %11, %14 : vector<16x1xf32>
    %16 = math.rsqrt %15 : vector<16x1xf32>
    %17 = vector.broadcast %16 : vector<16x1xf32> to vector<16x32xf32>
    %18 = arith.mulf %13, %17 : vector<16x32xf32>
    %c0_5 = arith.constant 0 : index
    %c0_6 = arith.constant 0 : index
    %19 = vector.load %arg2[%c0_5, %c0_6] : memref<1x32xf32, #tpu.memory_space<vmem>>, vector<1x32xf32>
    %20 = vector.broadcast %19 : vector<1x32xf32> to vector<16x32xf32>
    %21 = arith.mulf %18, %20 : vector<16x32xf32>
    %c0_7 = arith.constant 0 : index
    %c0_8 = arith.constant 0 : index
    %22 = vector.load %arg3[%c0_7, %c0_8] : memref<1x32xf32, #tpu.memory_space<vmem>>, vector<1x32xf32>
    %23 = vector.broadcast %22 : vector<1x32xf32> to vector<16x32xf32>
    %24 = arith.addf %21, %23 : vector<16x32xf32>
    %25 = arith.truncf %24 : vector<16x32xf32> to vector<16x32xbf16>
    %c0_9 = arith.constant 0 : index
    %c0_10 = arith.constant 0 : index
    %26 = vector.load %arg4[%c0_9, %c0_10] : memref<16x32xbf16, #tpu.memory_space<vmem>>, vector<16x32xbf16>
    tpu.vector_store %arg4[%c0_9, %c0_10], %25 {strides = array<i32>} : memref<16x32xbf16, #tpu.memory_space<vmem>>, vector<16x32xbf16>,
    return
  }
  func.func @transform_0(%arg0: i32) -> (i32, i32) {
    %c0_i32 = arith.constant 0 : i32
    %c0_i32_0 = arith.constant 0 : i32
    return %arg0, %c0_i32 : i32, i32
  }
  func.func @transform_1(%arg0: i32) -> (i32, i32) {
    %c0_i32 = arith.constant 0 : i32
    %c0_i32_0 = arith.constant 0 : i32
    %c0_i32_1 = arith.constant 0 : i32
    return %c0_i32, %c0_i32_0 : i32, i32
  }
  func.func @transform_2(%arg0: i32) -> (i32, i32) {
    %c0_i32 = arith.constant 0 : i32
    %c0_i32_0 = arith.constant 0 : i32
    %c0_i32_1 = arith.constant 0 : i32
    return %c0_i32, %c0_i32_0 : i32, i32
  }
  func.func @transform_3(%arg0: i32) -> (i32, i32) {
    %c0_i32 = arith.constant 0 : i32
    %c0_i32_0 = arith.constant 0 : i32
    return %arg0, %c0_i32 : i32, i32
  }
}

</mosaic_0001>

<llo_original>
// kernel: tpu_custom_call.1
$region0: #{tpu_custom_call.1}
  #allocation0 [shape = 'u32[]', space=smem, size = 0x4, offset = 0x4, fixed_abs, tag = 'smem constant byte address 0x4 - core index']
  #allocation1 [shape = 'u32[144,128]{1,0:T(1,128)}', space=vmem, size = 0x12000, scoped, tag = 'internal scratch']
  %s0 = inlined_call_operand.hbm [shape: f32[16,32], index: 0, kind: input, shape index: {}]
  %s1 = inlined_call_operand.vmem [shape: f32[1,32], index: 1, kind: input, shape index: {}]
  %s2 = inlined_call_operand.vmem [shape: f32[1,32], index: 2, kind: input, shape index: {}]
  %s3 = inlined_call_operand.hbm [shape: bf16[16,32], index: 3, kind: output, shape index: {}]
  %s4 = sld [smem:[#allocation0]]
  $region26: #{tpu_custom_call.1} parent=0
    _
  %s6 = ssub.s32 1, %s4
  %s7 = scalar_select 0, %s6, %s4
  $region1: #{tpu_custom_call.1} parent=0
    #allocation2 [shape = 'u8[8192]{0}', space=vmem, size = 0x2000, scoped, tag = 'input window, operand 0, single buffered']
    #allocation3 [shape = 's32[1]{0}', space=sflag, size = 0x4, scoped, tag = 'scoped memory for tpu_custom_call.1']
    #allocation4 [shape = 's32[1]{0}', space=sflag, size = 0x4, scoped, tag = 'scoped memory for tpu_custom_call.1']
    #allocation5 [shape = 'u8[4096]{0}', space=vmem, size = 0x1000, scoped, tag = 'output window, operand 0, single buffered']
    %8 = vsyncpa [#allocation3], 0
    %9 = vsyncpa [#allocation4], 0
    // Predicated region
    $region2: #{tpu_custom_call.1} parent=1 // pred_check
      _
    $region3: #{tpu_custom_call.1} parent=1 // pred_check_branch
      %11 = sbr.rel (0) target = $region5
    $region4: #{tpu_custom_call.1} parent=1 // pred_region
      %s13 = ssub.s32 256, 256
      %14 = vsyncadd [#allocation3], %s13
      %s15 = sshll.u32 [#allocation2], 4
      %s16 = int_to_ptr.vmem [resolvable:$true] %s15
      %21 = dma.hbm_to_vmem [thread:$0]  %s0, 256, %s16, [#allocation3], 128, 128, 8
    $region5: #{tpu_custom_call.1} parent=1 // pred_fallthru
      _
    // Predicated region
    $region6: #{tpu_custom_call.1} parent=1 // pred_check
      _
    $region7: #{tpu_custom_call.1} parent=1 // pred_check_branch
      %23 = sbr.rel (0) target = $region9
    $region8: #{tpu_custom_call.1} parent=1 // pred_region
      _
    $region9: #{tpu_custom_call.1} parent=1 // pred_fallthru
      _
    // Predicated region
    $region10: #{tpu_custom_call.1} parent=1 // pred_check
      _
    $region11: #{tpu_custom_call.1} parent=1 // pred_check_branch
      %25 = sbr.rel (0) target = $region13
    $region12: #{tpu_custom_call.1} parent=1 // pred_region
      _
    $region13: #{tpu_custom_call.1} parent=1 // pred_fallthru
      _
    // Predicated region
    $region14: #{tpu_custom_call.1} parent=1 // pred_check
      _
    $region15: #{tpu_custom_call.1} parent=1 // pred_check_branch
      %27 = sbr.rel (0) target = $region17
    $region16: #{tpu_custom_call.1} parent=1 // pred_region
      %28 = dma.done [#allocation3], 256
    $region17: #{tpu_custom_call.1} parent=1 // pred_fallthru
      _
    %v29 = vld [vmem:[#allocation2] sm:$0xff]
    %v30 = vld [vmem:[#allocation2 + $0x8] sm:$0xff]
    %vm31 = vcmask 261120
    %v32 = vsel %vm31, %v29, 0.0
    %33 = vadd.xlane.f32.xlu0 %v32
    %v34 = vpop.xlane.xlu0 %33
    %v35 = vsel %vm31, %v30, 0.0
    %36 = vadd.xlane.f32.xlu0 %v35
    %v37 = vpop.xlane.xlu0 %36
    %v38 = vrcp.pop 32.0
    %v39 = vmul.f32 %v34, %v38
    %v40 = vmul.f32 %v37, %v38
    %v41 = vsub.f32 %v29, %v39
    %v42 = vsub.f32 %v30, %v40
    %v43 = vmul.f32 %v41, %v41
    %v44 = vmul.f32 %v42, %v42
    %v45 = vsel %vm31, %v43, 0.0
    %46 = vadd.xlane.f32.xlu0 %v45
    %v47 = vpop.xlane.xlu0 %46
    %v48 = vsel %vm31, %v44, 0.0
    %49 = vadd.xlane.f32.xlu0 %v48
    %v50 = vpop.xlane.xlu0 %49
    %v51 = vmul.f32 %v47, %v38
    %v52 = vmul.f32 %v50, %v38
    %v53 = vadd.f32 %v51, 1e-12
    %v54 = vadd.f32 %v52, 1e-12
    %v55 = vrsqrt.pop %v53
    %v56 = vrsqrt.pop %v54
    %v57 = vmul.f32 %v41, %v55
    %v58 = vmul.f32 %v42, %v56
    %v59 = vld [vmem:[%s1] sm:$0x1]
    %v61 = vlaneseq
    %v62 = vshrl.u32 %v61, 7
    %v63 = vsub.s32 0, %v62
    %v64 = vrot.slane %v59, %v63
    %v66 = vmul.f32 %v57, %v64
    %v67 = vmul.f32 %v58, %v64
    %v68 = vld [vmem:[%s2] sm:$0x1]
    %v70 = vlaneseq
    %v71 = vshrl.u32 %v70, 7
    %v72 = vsub.s32 0, %v71
    %v73 = vrot.slane %v68, %v72
    %v75 = vadd.f32 %v66, %v73
    %v76 = vadd.f32 %v67, %v73
    %v77 = vpack.c.bf16 %v76, %v75
    %v79 = vunpack.c.l.b16 %v77
    %v80 = vunpack.c.h.b16 %v77
    %v81 = vpack.c.b16 %v79, %v79
    %v82 = vpack.c.b16 %v80, %v80
    %vm85 = vcmask 257024
    %86 = vst.msk [vmem:[#allocation5] sm:$0xf] %vm85, %v81
    %87 = vst.msk [vmem:[#allocation5 + $0x4] sm:$0xf] %vm85, %v82
    // Predicated region
    $region18: #{tpu_custom_call.1} parent=1 // pred_check
      _
    $region19: #{tpu_custom_call.1} parent=1 // pred_check_branch
      %89 = sbr.rel (0) target = $region21
    $region20: #{tpu_custom_call.1} parent=1 // pred_region
      %s91 = ssub.s32 128, 128
      %92 = vsyncadd [#allocation4], %s91
      %s93 = sshll.u32 [#allocation5], 4
      %s94 = int_to_ptr.vmem [resolvable:$true] %s93
      %99 = dma.vmem_to_hbm [thread:$0]  %s94, 128, %s3, [#allocation4], 64, 64, 4
    $region21: #{tpu_custom_call.1} parent=1 // pred_fallthru
      _
    // Predicated region
    $region22: #{tpu_custom_call.1} parent=1 // pred_check
      _
    $region23: #{tpu_custom_call.1} parent=1 // pred_check_branch
      %101 = sbr.rel (0) target = $region25
    $region24: #{tpu_custom_call.1} parent=1 // pred_region
      %102 = dma.done [#allocation4], 128
    $region25: #{tpu_custom_call.1} parent=1 // pred_fallthru
      _
    %103 = vsyncpa [#allocation3], 1
    %104 = vsyncpa [#allocation4], 1

</llo_original>
